<compile_context>
chip_gen: v6e
topology: v6e:2x2x1
jax: 0.10.0
libtpu: 0.0.40
codegen_flags: <defaults>
</compile_context>

<pallas_src>
import jax
import jax.numpy as jnp
from jax import lax
from jax.experimental import pallas as pl
from jax.experimental.pallas import tpu as pltpu

HIDDEN = 200          # fixed by the PyTorch module
HIDDEN_PAD = 256      # lane/MXU-friendly padded hidden width (>= HIDDEN + 1)
OUT_PAD = 128         # lane-dense logits width; real action_size sliced in wrapper


def actor_kernel(x_ref, w1_ref, b1_ref, w2_ref, out_ref):
    # x_ref  : (BLK, d_in)           f32   states; cast to bf16 here (fused cast)
    # w1_ref : (d_in, HIDDEN_PAD)    bf16  resident; cols >= HIDDEN are zero
    # b1_ref : (1, HIDDEN_PAD)       f32   resident; col HIDDEN == 1.0 (const-1 unit)
    # w2_ref : (HIDDEN_PAD, OUT_PAD) bf16  resident; row HIDDEN == b2 (folded bias)
    # out_ref: (BLK, OUT_PAD)        bf16  sigmoid probs (cols >= action_size junk)

    # Layer 1 on the MXU (bf16 operands, f32 accumulation) + f32 epilogue.
    xb = x_ref[...].astype(jnp.bfloat16)
    h = jnp.dot(xb, w1_ref[...], preferred_element_type=jnp.float32)
    h = jnp.maximum(h + b1_ref[...], 0.0)          # col HIDDEN == relu(0 + 1) == 1.0

    # Layer 2: b2 rides on the constant-1 hidden unit -> single dot, no bias add.
    logits = jnp.dot(h.astype(jnp.bfloat16), w2_ref[...],
                     preferred_element_type=jnp.float32)
    out_ref[...] = jax.nn.sigmoid(logits).astype(out_ref.dtype)


def pack_actor_params(w1, b1, w2, b2, hidden_pad=HIDDEN_PAD, out_pad=OUT_PAD):
    """Pack (W1, b1, W2, b2) -> (w1p bf16, b1p f32, w2p bf16).

    w1: (d_in, H), b1: (H,), w2: (H, A), b2: (A,).  Weights are stored
    pre-transposed as (in_features, out_features) so the kernel computes x @ W.
    """
    d_in, hidden = w1.shape
    action_size = w2.shape[1]
    assert hidden < hidden_pad, "need one spare hidden slot for the bias unit"
    assert action_size <= out_pad

    # W1: tile-aligned (d_in, hidden_pad); padded hidden columns are zero.
    w1p = jnp.zeros((d_in, hidden_pad), jnp.float32).at[:, :hidden].set(w1)

    # b1 stays f32 (applied in the f32 epilogue); spare column `hidden` gets 1.0
    # so that relu(0*x + 1) == 1 (constant-1 unit used to carry b2).
    b1p = jnp.zeros((1, hidden_pad), jnp.float32).at[0, :hidden].set(b1)
    b1p = b1p.at[0, hidden].set(1.0)

    # W2: rows 0..hidden-1 = W2, row `hidden` = b2; remaining padding is zero and
    # contributes nothing to the contraction.
    w2p = jnp.zeros((hidden_pad, out_pad), jnp.float32)
    w2p = w2p.at[:hidden, :action_size].set(w2)
    w2p = w2p.at[hidden, :action_size].set(b2)

    return w1p.astype(jnp.bfloat16), b1p, w2p.astype(jnp.bfloat16)


def actor_forward(x, w1p, b1p, w2p, *, action_size, num_blocks=2):
    """x: (N, input_size) f32 batched states -> (N, action_size) f32 action probs.

    num_blocks=2 keeps one grid step per v7x TensorCore; on v5e/v6e the second
    step is ~0.35 us of overhead (negligible for this kernel).
    """
    n, d_in = x.shape
    hidden_pad = w1p.shape[1]
    assert w1p.shape == (d_in, hidden_pad)
    assert b1p.shape == (1, hidden_pad)
    a_pad = w2p.shape[1]

    # Whole-batch row blocks, rounded to a 16-row multiple (bf16 output sublane tile).
    rows_per_block = pl.cdiv(n, num_blocks)
    block_rows = max(16, pl.cdiv(rows_per_block, 16) * 16)
    n_pad = block_rows * num_blocks
    if n_pad != n:
        # Only emitted for ragged batches; keeps padded rows defined (no OOB reads).
        x = jnp.pad(x, ((0, n_pad - n), (0, 0)))

    out = pl.pallas_call(
        actor_kernel,
        out_shape=jax.ShapeDtypeStruct((n_pad, a_pad), jnp.bfloat16),
        grid=(num_blocks,),
        in_specs=[
            pl.BlockSpec((block_rows, d_in), lambda i: (i, 0)),
            pl.BlockSpec(w1p.shape, lambda i: (0, 0)),   # VMEM-resident
            pl.BlockSpec(b1p.shape, lambda i: (0, 0)),   # VMEM-resident
            pl.BlockSpec(w2p.shape, lambda i: (0, 0)),   # VMEM-resident
        ],
        out_specs=pl.BlockSpec((block_rows, a_pad), lambda i: (i, 0)),
        compiler_params=pltpu.CompilerParams(
            dimension_semantics=("parallel",)),
    )(x, w1p, b1p, w2p)
    return out[:n, :action_size].astype(jnp.float32)


def init_actor_params(key, input_size, action_size, hidden=HIDDEN):
    """Deterministic init mimicking nn.Linear's U(-1/sqrt(fan_in), 1/sqrt(fan_in)).
    Weights stored transposed: (in_features, out_features)."""
    k1, k2, k3, k4 = jax.random.split(key, 4)
    lim1 = 1.0 / jnp.sqrt(jnp.float32(input_size))
    lim2 = 1.0 / jnp.sqrt(jnp.float32(hidden))
    w1 = jax.random.uniform(k1, (input_size, hidden), jnp.float32, -lim1, lim1)
    b1 = jax.random.uniform(k2, (hidden,), jnp.float32, -lim1, lim1)
    w2 = jax.random.uniform(k3, (hidden, action_size), jnp.float32, -lim2, lim2)
    b2 = jax.random.uniform(k4, (action_size,), jnp.float32, -lim2, lim2)
    return w1, b1, w2, b2


if __name__ == "__main__":
    # Shapes consistent with Actor(input_size, action_size): a batched rollout of
    # 500 states, input_size=64, hidden=200 (fixed), action_size=2.  500 is
    # deliberately not a multiple of the row block to exercise the pad+slice path.
    INPUT_SIZE, ACTION_SIZE = 64, 2
    N_STATES = 500

    key = jax.random.PRNGKey(0)
    kx, kp = jax.random.split(key)
    x = jax.random.normal(kx, (N_STATES, INPUT_SIZE), jnp.float32)
    w1, b1, w2, b2 = init_actor_params(kp, INPUT_SIZE, ACTION_SIZE)
    w1p, b1p, w2p = pack_actor_params(w1, b1, w2, b2)

    out = actor_forward(x, w1p, b1p, w2p, action_size=ACTION_SIZE, num_blocks=2)
    out = jax.block_until_ready(out)

    # Reference: identical math on the same bf16-quantized operands, exact f32
    # matmuls (differences vs. the kernel: accumulation order, transcendental
    # implementation, and the final bf16 output store).
    f32 = jnp.float32
    xq = x.astype(jnp.bfloat16).astype(f32)
    w1q = w1.astype(jnp.bfloat16).astype(f32)
    w2q = w2.astype(jnp.bfloat16).astype(f32)
    b2q = b2.astype(jnp.bfloat16).astype(f32)
    hp = lax.Precision.HIGHEST
    h_ref = jnp.maximum(jnp.dot(xq, w1q, precision=hp) + b1, 0.0)
    ref = jax.nn.sigmoid(
        jnp.dot(h_ref.astype(jnp.bfloat16).astype(f32), w2q, precision=hp) + b2q)

    assert out.shape == (N_STATES, ACTION_SIZE)
    assert jnp.allclose(out, ref, atol=1e-2, rtol=1e-2), \
        f"max abs err = {float(jnp.max(jnp.abs(out - ref)))}"

    print("KERNEL_OK")
</pallas_src>

<mosaic_0001>
module attributes {stable_mosaic.version = 11 : i64} {
  func.func @actor_kernel(%arg0: i32, %arg1: memref<256x64xf32, #tpu.memory_space<vmem>>, %arg2: memref<64x256xbf16, #tpu.memory_space<vmem>>, %arg3: memref<1x256xf32, #tpu.memory_space<vmem>>, %arg4: memref<256x128xbf16, #tpu.memory_space<vmem>>, %arg5: memref<256x128xbf16, #tpu.memory_space<vmem>>) attributes {dimension_semantics = [#tpu.dimension_semantics<parallel>], iteration_bounds = array<i64: 2>, scalar_prefetch = 0 : i64, scratch_operands = 0 : i64, tpu.core_type = #tpu.core_type<tc>, window_params = [{transform_indices = @transform_0, window_bounds = array<i64: 256, 64>}, {pipeline_mode = #tpu.pipeline_mode<synchronous>, transform_indices = @transform_1, window_bounds = array<i64: 64, 256>}, {pipeline_mode = #tpu.pipeline_mode<synchronous>, transform_indices = @transform_2, window_bounds = array<i64: 1, 256>}, {pipeline_mode = #tpu.pipeline_mode<synchronous>, transform_indices = @transform_3, window_bounds = array<i64: 256, 128>}, {transform_indices = @transform_4, window_bounds = array<i64: 256, 128>}]} {
    %c0 = arith.constant 0 : index
    %c0_0 = arith.constant 0 : index
    %0 = vector.load %arg1[%c0, %c0_0] : memref<256x64xf32, #tpu.memory_space<vmem>>, vector<256x64xf32>
    %1 = arith.truncf %0 : vector<256x64xf32> to vector<256x64xbf16>
    %c0_1 = arith.constant 0 : index
    %c0_2 = arith.constant 0 : index
    %2 = vector.load %arg2[%c0_1, %c0_2] : memref<64x256xbf16, #tpu.memory_space<vmem>>, vector<64x256xbf16>
    %cst = arith.constant dense<0.000000e+00> : vector<256x256xf32>
    %3 = tpu.matmul %1, %2, %cst {dimension_numbers = #tpu.dot_dimension_numbers<[1], [0], [0], [1], [0, 0, 1, 1], [], []>} : vector<256x64xbf16>, vector<64x256xbf16>, vector<256x256xf32> -> vector<256x256xf32>
    %c0_3 = arith.constant 0 : index
    %c0_4 = arith.constant 0 : index
    %4 = vector.load %arg3[%c0_3, %c0_4] : memref<1x256xf32, #tpu.memory_space<vmem>>, vector<1x256xf32>
    %5 = vector.broadcast %4 : vector<1x256xf32> to vector<256x256xf32>
    %6 = arith.addf %3, %5 : vector<256x256xf32>
    %cst_5 = arith.constant 0.000000e+00 : f32
    %7 = vector.broadcast %cst_5 : f32 to vector<256x256xf32>
    %8 = arith.maximumf %6, %7 : vector<256x256xf32>
    %9 = arith.truncf %8 : vector<256x256xf32> to vector<256x256xbf16>
    %c0_6 = arith.constant 0 : index
    %c0_7 = arith.constant 0 : index
    %10 = vector.load %arg4[%c0_6, %c0_7] : memref<256x128xbf16, #tpu.memory_space<vmem>>, vector<256x128xbf16>
    %cst_8 = arith.constant dense<0.000000e+00> : vector<256x128xf32>
    %11 = tpu.matmul %9, %10, %cst_8 {dimension_numbers = #tpu.dot_dimension_numbers<[1], [0], [0], [1], [0, 0, 1, 1], [], []>} : vector<256x256xbf16>, vector<256x128xbf16>, vector<256x128xf32> -> vector<256x128xf32>
    %12 = arith.negf %11 : vector<256x128xf32>
    %13 = math.exp %12 : vector<256x128xf32>
    %cst_9 = arith.constant 1.000000e+00 : f32
    %14 = vector.broadcast %cst_9 : f32 to vector<256x128xf32>
    %15 = arith.addf %14, %13 : vector<256x128xf32>
    %16 = arith.divf %14, %15 : vector<256x128xf32>
    %17 = arith.truncf %16 : vector<256x128xf32> to vector<256x128xbf16>
    %c0_10 = arith.constant 0 : index
    %c0_11 = arith.constant 0 : index
    %18 = vector.load %arg5[%c0_10, %c0_11] : memref<256x128xbf16, #tpu.memory_space<vmem>>, vector<256x128xbf16>
    tpu.vector_store %arg5[%c0_10, %c0_11], %17 {strides = array<i32>} : memref<256x128xbf16, #tpu.memory_space<vmem>>, vector<256x128xbf16>,
    return
  }
  func.func @transform_0(%arg0: i32) -> (i32, i32) {
    %c0_i32 = arith.constant 0 : i32
    %c0_i32_0 = arith.constant 0 : i32
    return %arg0, %c0_i32 : i32, i32
  }
  func.func @transform_1(%arg0: i32) -> (i32, i32) {
    %c0_i32 = arith.constant 0 : i32
    %c0_i32_0 = arith.constant 0 : i32
    %c0_i32_1 = arith.constant 0 : i32
    return %c0_i32, %c0_i32_0 : i32, i32
  }
  func.func @transform_2(%arg0: i32) -> (i32, i32) {
    %c0_i32 = arith.constant 0 : i32
    %c0_i32_0 = arith.constant 0 : i32
    %c0_i32_1 = arith.constant 0 : i32
    return %c0_i32, %c0_i32_0 : i32, i32
  }
  func.func @transform_3(%arg0: i32) -> (i32, i32) {
    %c0_i32 = arith.constant 0 : i32
    %c0_i32_0 = arith.constant 0 : i32
    %c0_i32_1 = arith.constant 0 : i32
    return %c0_i32, %c0_i32_0 : i32, i32
  }
  func.func @transform_4(%arg0: i32) -> (i32, i32) {
    %c0_i32 = arith.constant 0 : i32
    %c0_i32_0 = arith.constant 0 : i32
    return %arg0, %c0_i32 : i32, i32
  }
}

</mosaic_0001>

<llo_original>
// kernel: tpu_custom_call.1
$region0: #{tpu_custom_call.1}
  #allocation0 [shape = 'u32[]', space=smem, size = 0x4, offset = 0x4, fixed_abs, tag = 'smem constant byte address 0x4 - core index']
  #allocation1 [shape = 'u32[144,128]{1,0:T(1,128)}', space=vmem, size = 0x12000, scoped, tag = 'internal scratch']
  %s0 = inlined_call_operand.vmem [shape: f32[512,64], index: 0, kind: input, shape index: {}]
  %s1 = inlined_call_operand.vmem [shape: bf16[64,256], index: 1, kind: input, shape index: {}]
  %s2 = inlined_call_operand.vmem [shape: f32[1,256], index: 2, kind: input, shape index: {}]
  %s3 = inlined_call_operand.vmem [shape: bf16[256,128], index: 3, kind: input, shape index: {}]
  %s4 = inlined_call_operand.hbm [shape: bf16[512,128], index: 4, kind: output, shape index: {}]
  %s5 = sld [smem:[#allocation0]]
  $region49: #{tpu_custom_call.1} parent=0
    _
  %s7 = ssub.s32 1, %s5
  %s8 = scalar_select 0, %s7, %s5
  $region1: #{tpu_custom_call.1} parent=0
    #allocation2 [shape = 'u8[131072]{0}', space=vmem, size = 0x20000, scoped, tag = 'output window, operand 0']
    #allocation3 [shape = 's32[2]{0}', space=sflag, size = 0x8, scoped, tag = 'scoped memory for tpu_custom_call.1']
    %9 = vsyncpa [#allocation3], 0
    %s10 = scalar_lea.sflag [#allocation3], 1
    %11 = vsyncpa %s10, 0
    loop: start=0, step=1, limit=4
    $region2: #{tpu_custom_call.1} parent=1 // loop_pre_header
      _
    $region3: #{tpu_custom_call.1} parent=1 // loop_header
      %s13 = sphi 0, %s17
      %p14 = scmp.ge.s32.totalorder %s13, 4
      %s23 = sphi 0, %s25
      %s26 = sphi 0, %s23
      %s27 = sphi 0, %s26
      %s43 = sphi 0, %s27
      %s47 = sphi 0, %s47
      %s49 = sphi 0, %s47
      %s50 = sphi 0, %s49
      %s64 = sphi 0, %s50
      %s68 = sphi 0, %s68
      %s70 = sphi 0, %s68
      %s71 = sphi 0, %s70
      %s85 = sphi 0, %s71
      %s89 = sphi 0, %s89
      %s91 = sphi 0, %s89
      %s92 = sphi 0, %s91
      %s106 = sphi 0, %s92
      %s112 = sphi 0, %s114
      %s115 = sphi 0, %s112
      %s116 = sphi 0, %s115
      %s132 = sphi 0, %s116
    $region4: #{tpu_custom_call.1} parent=1 // loop_header_branch
      %16 = sbr.rel (%p14) target = $region8
    $region5: #{tpu_custom_call.1} parent=1 // loop_body
      %s18 = ssub.s32 %s13, 1
      %s19 = ssub.s32 %s13, 2
      %s20 = sadd.s32 %s13, 1
      %s21 = ssub.s32 %s13, %s20
      %p22 = scmp.eq.s32.totalorder %s21, 0
      %s24 = sadd.s32 %s23, 1
      %s25 = scalar_select %p22, %s23, %s24
      %p28 = pneg %p22
      %p29 = scmp.eq.s32.totalorder %s13, 1
      %p30 = por %p28, %p29
      %p31 = scmp.ne.s32.totalorder %s23, %s26
      %p32 = scmp.eq.s32.totalorder %s13, 0
      %p33 = por %p31, %p32
      %p34 = scmp.ne.s32.totalorder %s23, %s26
      %p35 = scmp.eq.s32.totalorder %s18, 1
      %p36 = por %p34, %p35
      %p37 = scmp.ne.s32.totalorder %s26, %s27
      %p38 = scmp.eq.s32.totalorder %s18, 0
      %p39 = por %p37, %p38
      %p40 = scmp.ne.s32.totalorder %s26, %s27
      %p41 = scmp.eq.s32.totalorder %s19, 1
      %p42 = por %p40, %p41
      %p44 = scmp.ne.s32.totalorder %s27, %s43
      %p45 = scmp.eq.s32.totalorder %s19, 0
      %p46 = por %p44, %p45
      %s48 = sadd.s32 %s47, 1
      %p51 = scmp.eq.s32.totalorder %s13, 1
      %p52 = scmp.ne.s32.totalorder %s47, %s49
      %p53 = scmp.eq.s32.totalorder %s13, 0
      %p54 = por %p52, %p53
      %p55 = scmp.ne.s32.totalorder %s47, %s49
      %p56 = scmp.eq.s32.totalorder %s18, 1
      %p57 = por %p55, %p56
      %p58 = scmp.ne.s32.totalorder %s49, %s50
      %p59 = scmp.eq.s32.totalorder %s18, 0
      %p60 = por %p58, %p59
      %p61 = scmp.ne.s32.totalorder %s49, %s50
      %p62 = scmp.eq.s32.totalorder %s19, 1
      %p63 = por %p61, %p62
      %p65 = scmp.ne.s32.totalorder %s50, %s64
      %p66 = scmp.eq.s32.totalorder %s19, 0
      %p67 = por %p65, %p66
      %s69 = sadd.s32 %s68, 1
      %p72 = scmp.eq.s32.totalorder %s13, 1
      %p73 = scmp.ne.s32.totalorder %s68, %s70
      %p74 = scmp.eq.s32.totalorder %s13, 0
      %p75 = por %p73, %p74
      %p76 = scmp.ne.s32.totalorder %s68, %s70
      %p77 = scmp.eq.s32.totalorder %s18, 1
      %p78 = por %p76, %p77
      %p79 = scmp.ne.s32.totalorder %s70, %s71
      %p80 = scmp.eq.s32.totalorder %s18, 0
      %p81 = por %p79, %p80
      %p82 = scmp.ne.s32.totalorder %s70, %s71
      %p83 = scmp.eq.s32.totalorder %s19, 1
      %p84 = por %p82, %p83
      %p86 = scmp.ne.s32.totalorder %s71, %s85
      %p87 = scmp.eq.s32.totalorder %s19, 0
      %p88 = por %p86, %p87
      %s90 = sadd.s32 %s89, 1
      %p93 = scmp.eq.s32.totalorder %s13, 1
      %p94 = scmp.ne.s32.totalorder %s89, %s91
      %p95 = scmp.eq.s32.totalorder %s13, 0
      %p96 = por %p94, %p95
      %p97 = scmp.ne.s32.totalorder %s89, %s91
      %p98 = scmp.eq.s32.totalorder %s18, 1
      %p99 = por %p97, %p98
      %p100 = scmp.ne.s32.totalorder %s91, %s92
      %p101 = scmp.eq.s32.totalorder %s18, 0
      %p102 = por %p100, %p101
      %p103 = scmp.ne.s32.totalorder %s91, %s92
      %p104 = scmp.eq.s32.totalorder %s19, 1
      %p105 = por %p103, %p104
      %p107 = scmp.ne.s32.totalorder %s92, %s106
      %p108 = scmp.eq.s32.totalorder %s19, 0
      %p109 = por %p107, %p108
      %s110 = ssub.s32 %s13, %s20
      %p111 = scmp.eq.s32.totalorder %s110, 0
      %s113 = sadd.s32 %s112, 1
      %s114 = scalar_select %p111, %s112, %s113
      %p117 = pneg %p111
      %p118 = scmp.eq.s32.totalorder %s13, 1
      %p119 = por %p117, %p118
      %p120 = scmp.ne.s32.totalorder %s112, %s115
      %p121 = scmp.eq.s32.totalorder %s13, 0
      %p122 = por %p120, %p121
      %p123 = scmp.ne.s32.totalorder %s112, %s115
      %p124 = scmp.eq.s32.totalorder %s18, 1
      %p125 = por %p123, %p124
      %p126 = scmp.ne.s32.totalorder %s115, %s116
      %p127 = scmp.eq.s32.totalorder %s18, 0
      %p128 = por %p126, %p127
      %p129 = scmp.ne.s32.totalorder %s115, %s116
      %p130 = scmp.eq.s32.totalorder %s19, 1
      %p131 = por %p129, %p130
      %p133 = scmp.ne.s32.totalorder %s116, %s132
      %p134 = scmp.eq.s32.totalorder %s19, 0
      %p135 = por %p133, %p134
      %p136 = scmp.le.s32.totalorder 1, %s13
      %p137 = scmp.lt.s32.totalorder %s13, 3
      %p138 = pnand %p136, %p137
      %p139 = pneg %p138
      // Predicated region
      $region9: #{tpu_custom_call.1} parent=5 // pred_check
        _
      $region10: #{tpu_custom_call.1} parent=5 // pred_check_branch
        %141 = sbr.rel (%p138) target = $region12
      $region11: #{tpu_custom_call.1} parent=5 // pred_region
        %s142 = ssub.s32 %s13, 1
        // Predicated region
        $region13: #{tpu_custom_call.1} parent=11 // pred_check
          %p143 = pneg %p60
        $region14: #{tpu_custom_call.1} parent=11 // pred_check_branch
          %145 = sbr.rel (%p143) target = $region16
        $region15: #{tpu_custom_call.1} parent=11 // pred_region
          _
        $region16: #{tpu_custom_call.1} parent=11 // pred_fallthru
          _
        // Predicated region
        $region17: #{tpu_custom_call.1} parent=11 // pred_check
          %p146 = pneg %p81
        $region18: #{tpu_custom_call.1} parent=11 // pred_check_branch
          %148 = sbr.rel (%p146) target = $region20
        $region19: #{tpu_custom_call.1} parent=11 // pred_region
          _
        $region20: #{tpu_custom_call.1} parent=11 // pred_fallthru
          _
        // Predicated region
        $region21: #{tpu_custom_call.1} parent=11 // pred_check
          %p149 = pneg %p102
        $region22: #{tpu_custom_call.1} parent=11 // pred_check_branch
          %151 = sbr.rel (%p149) target = $region24
        $region23: #{tpu_custom_call.1} parent=11 // pred_region
          _
        $region24: #{tpu_custom_call.1} parent=11 // pred_fallthru
          _
      $region12: #{tpu_custom_call.1} parent=5 // pred_fallthru
        _
      %p152 = scmp.lt.s32.totalorder %s13, 2
      // Predicated region
      $region25: #{tpu_custom_call.1} parent=5 // pred_check
        %p153 = pneg %p152
      $region26: #{tpu_custom_call.1} parent=5 // pred_check_branch
        %155 = sbr.rel (%p153) target = $region28
      $region27: #{tpu_custom_call.1} parent=5 // pred_region
        // Predicated region
        $region29: #{tpu_custom_call.1} parent=27 // pred_check
          %p156 = pneg %p33
        $region30: #{tpu_custom_call.1} parent=27 // pred_check_branch
          %158 = sbr.rel (%p156) target = $region32
        $region31: #{tpu_custom_call.1} parent=27 // pred_region
          %s159 = smul.u32 32, %s13
          %p160 = scmp.lt.s32.totalorder %s159, 63
          %s161 = scalar_select %p160, %s159, 63
          %s162 = smul.addr %s161, 8
          %s163 = scalar_lea.vmem %s0, %s162
          %s164 = smul.u32 32, %s13
        $region32: #{tpu_custom_call.1} parent=27 // pred_fallthru
          _
      $region28: #{tpu_custom_call.1} parent=5 // pred_fallthru
        _
      %p165 = scmp.le.s32.totalorder 1, %s13
      %p166 = scmp.lt.s32.totalorder %s13, 3
      %p167 = pnand %p165, %p166
      %p168 = pneg %p167
      // Predicated region
      $region33: #{tpu_custom_call.1} parent=5 // pred_check
        _
      $region34: #{tpu_custom_call.1} parent=5 // pred_check_branch
        %170 = sbr.rel (%p167) target = $region36
      $region35: #{tpu_custom_call.1} parent=5 // pred_region
        %s171 = ssub.s32 %s13, 1
        %s172 = smul.u32 32, %s18
        %p173 = scmp.lt.s32.totalorder %s172, 63
        %s174 = scalar_select %p173, %s172, 63
        %s175 = smul.addr %s174, 8
        %s176 = scalar_lea.vmem %s0, %s175
        %p177 = pneg %p39
        %p178 = pneg %p36
        %p179 = pneg %p60
        %p180 = pneg %p57
        %p181 = pneg %p81
        %p182 = pneg %p78
        %p183 = pneg %p102
        %p184 = pneg %p99
        %p185 = pneg %p128
        %p186 = pneg %p125
        %s187 = sand.u32 %s115, 1
        %s188 = scalar_lea.sflag [#allocation3], %s187
        %s189 = sand.u32 %s115, 1
        %s190 = smul.addr %s189, 128
        %s191 = scalar_lea.vmem [#allocation2], %s190
        %s192 = smul.u32 32, %s18
        %p193 = scmp.lt.s32.totalorder %s192, 63
        %s194 = scalar_select %p193, %s192, 63
        %s195 = smul.addr %s194, 8
        %s196 = scalar_lea.vmem %s0, %s195
        %s197 = smul.u32 32, %s18
        %s198 = smul.u32 32, %s18
        %v200 = vld [vmem:[%s196] sm:$0xff]
        %v201 = vld [vmem:[%s196 + $0x8] sm:$0xff]
        %v202 = vld [vmem:[%s196 + $0x10] sm:$0xff]
        %v203 = vld [vmem:[%s196 + $0x18] sm:$0xff]
        %v204 = vld [vmem:[%s196 + $0x20] sm:$0xff]
        %v205 = vld [vmem:[%s196 + $0x28] sm:$0xff]
        %v206 = vld [vmem:[%s196 + $0x30] sm:$0xff]
        %v207 = vld [vmem:[%s196 + $0x38] sm:$0xff]
        %v208 = vld [vmem:[%s196 + $0x40] sm:$0xff]
        %v209 = vld [vmem:[%s196 + $0x48] sm:$0xff]
        %v210 = vld [vmem:[%s196 + $0x50] sm:$0xff]
        %v211 = vld [vmem:[%s196 + $0x58] sm:$0xff]
        %v212 = vld [vmem:[%s196 + $0x60] sm:$0xff]
        %v213 = vld [vmem:[%s196 + $0x68] sm:$0xff]
        %v214 = vld [vmem:[%s196 + $0x70] sm:$0xff]
        %v215 = vld [vmem:[%s196 + $0x78] sm:$0xff]
        %v216 = vld [vmem:[%s196 + $0x80] sm:$0xff]
        %v217 = vld [vmem:[%s196 + $0x88] sm:$0xff]
        %v218 = vld [vmem:[%s196 + $0x90] sm:$0xff]
        %v219 = vld [vmem:[%s196 + $0x98] sm:$0xff]
        %v220 = vld [vmem:[%s196 + $0xa0] sm:$0xff]
        %v221 = vld [vmem:[%s196 + $0xa8] sm:$0xff]
        %v222 = vld [vmem:[%s196 + $0xb0] sm:$0xff]
        %v223 = vld [vmem:[%s196 + $0xb8] sm:$0xff]
        %v224 = vld [vmem:[%s196 + $0xc0] sm:$0xff]
        %v225 = vld [vmem:[%s196 + $0xc8] sm:$0xff]
        %v226 = vld [vmem:[%s196 + $0xd0] sm:$0xff]
        %v227 = vld [vmem:[%s196 + $0xd8] sm:$0xff]
        %v228 = vld [vmem:[%s196 + $0xe0] sm:$0xff]
        %v229 = vld [vmem:[%s196 + $0xe8] sm:$0xff]
        %v230 = vld [vmem:[%s196 + $0xf0] sm:$0xff]
        %v231 = vld [vmem:[%s196 + $0xf8] sm:$0xff]
        %v232 = vpack.c.bf16 %v201, %v200
        %v233 = vpack.c.bf16 %v203, %v202
        %v234 = vpack.c.bf16 %v205, %v204
        %v235 = vpack.c.bf16 %v207, %v206
        %v236 = vpack.c.bf16 %v209, %v208
        %v237 = vpack.c.bf16 %v211, %v210
        %v238 = vpack.c.bf16 %v213, %v212
        %v239 = vpack.c.bf16 %v215, %v214
        %v240 = vpack.c.bf16 %v217, %v216
        %v241 = vpack.c.bf16 %v219, %v218
        %v242 = vpack.c.bf16 %v221, %v220
        %v243 = vpack.c.bf16 %v223, %v222
        %v244 = vpack.c.bf16 %v225, %v224
        %v245 = vpack.c.bf16 %v227, %v226
        %v246 = vpack.c.bf16 %v229, %v228
        %v247 = vpack.c.bf16 %v231, %v230
        %v248 = vld [vmem:[%s1] sm:$0xff]
        %v249 = vld [vmem:[%s1 + $0x8] sm:$0xff]
        %v250 = vld [vmem:[%s1 + $0x10] sm:$0xff]
        %v251 = vld [vmem:[%s1 + $0x18] sm:$0xff]
        %v252 = vld [vmem:[%s1 + $0x20] sm:$0xff]
        %v253 = vld [vmem:[%s1 + $0x28] sm:$0xff]
        %v254 = vld [vmem:[%s1 + $0x30] sm:$0xff]
        %v255 = vld [vmem:[%s1 + $0x38] sm:$0xff]
        %v256 = vld [vmem:[%s2] sm:$0x3]
        %v258 = vlaneseq
        %v259 = vshrl.u32 %v258, 7
        %v260 = vsub.s32 0, %v259
        %v261 = vrot.slane %v256, %v260
        %v262 = vlaneseq
        %v263 = vshrl.u32 %v262, 7
        %v264 = vsub.s32 1, %v263
        %v265 = vrot.slane %v256, %v264
        %v276 = vunpack.c.l.b16 %v248
        %v277 = vunpack.c.h.b16 %v248
        %v278 = vunpack.c.l.b16 %v249
        %v279 = vunpack.c.h.b16 %v249
        %v280 = vunpack.c.l.b16 %v250
        %v281 = vunpack.c.h.b16 %v250
        %v282 = vunpack.c.l.b16 %v251
        %v283 = vunpack.c.h.b16 %v251
        %v284 = vunpack.c.l.b16 %v252
        %v285 = vunpack.c.h.b16 %v252
        %v286 = vunpack.c.l.b16 %v253
        %v287 = vunpack.c.h.b16 %v253
        %v288 = vunpack.c.l.b16 %v254
        %v289 = vunpack.c.h.b16 %v254
        %v290 = vunpack.c.l.b16 %v255
        %v291 = vunpack.c.h.b16 %v255
        %v292 = vpack.c.b16 %v278, %v276
        %v293 = vpack.c.b16 %v279, %v277
        %v294 = vpack.c.b16 %v282, %v280
        %v295 = vpack.c.b16 %v283, %v281
        %v296 = vpack.c.b16 %v286, %v284
        %v297 = vpack.c.b16 %v287, %v285
        %v298 = vpack.c.b16 %v290, %v288
        %v299 = vpack.c.b16 %v291, %v289
        %vm308 = vcmask 523264
        %v310 = vsel %vm308, %v232, 0
        %v313 = vsel %vm308, %v233, 0
        %v316 = vsel %vm308, %v234, 0
        %v319 = vsel %vm308, %v235, 0
        %v322 = vsel %vm308, %v236, 0
        %v325 = vsel %vm308, %v237, 0
        %v328 = vsel %vm308, %v238, 0
        %v331 = vsel %vm308, %v239, 0
        %v334 = vsel %vm308, %v240, 0
        %v337 = vsel %vm308, %v241, 0
        %v340 = vsel %vm308, %v242, 0
        %v343 = vsel %vm308, %v243, 0
        %v346 = vsel %vm308, %v244, 0
        %v349 = vsel %vm308, %v245, 0
        %v352 = vsel %vm308, %v246, 0
        %v355 = vsel %vm308, %v247, 0
        %357 = vmatprep.subr.bf16.mxu0 0
        %358 = vmatpush1.bf16.msra.mxu0 0
        %359 = vmatprep.subr.bf16.mxu0 0
        %360 = vmatpush1.bf16.msra.mxu0 0
        %361 = vmatprep.subr.bf16.mxu0 0
        %362 = vmatpush1.bf16.msra.mxu0 0
        %363 = vmatprep.subr.bf16.mxu0 0
        %364 = vmatpush1.bf16.msra.mxu0 0
        %365 = vmatprep.subr.bf16.mxu0 %v299
        %366 = vmatpush1.bf16.msra.mxu0 %v298
        %367 = vmatprep.subr.bf16.mxu0 %v297
        %368 = vmatpush1.bf16.msra.mxu0 %v296
        %369 = vmatprep.subr.bf16.mxu0 %v295
        %370 = vmatpush1.bf16.msra.mxu0 %v294
        %371 = vmatprep.subr.bf16.mxu0 %v293
        %372 = vmatpush1.bf16.msra.mxu0 %v292
        %373 = vmatprep.subr.bf16.mxu0 0
        %374 = vmatpush2.bf16.msra.mxu0 0
        %375 = vmatprep.subr.bf16.mxu0 0
        %376 = vmatpush2.bf16.msra.mxu0 0
        %377 = vmatprep.subr.bf16.mxu0 0
        %378 = vmatpush2.bf16.msra.mxu0 0
        %379 = vmatprep.subr.bf16.mxu0 0
        %380 = vmatpush2.bf16.msra.mxu0 0
        %381 = vmatprep.subr.bf16.mxu0 0
        %382 = vmatpush2.bf16.msra.mxu0 0
        %383 = vmatprep.subr.bf16.mxu0 0
        %384 = vmatpush2.bf16.msra.mxu0 0
        %385 = vmatprep.subr.bf16.mxu0 0
        %386 = vmatpush2.bf16.msra.mxu0 0
        %387 = vmatprep.subr.bf16.mxu0 0
        %388 = vmatpush2.bf16.msra.mxu0 0
        %389 = vmatprep.mubr.bf16.mxu0 0
        %390 = vmatmul.mubr.bf16.gmra.mxu0 %v310
        %v391 = vpop.f32.mrf.mxu0
        %v392 = vadd.f32 %v261, %v391
        %v393 = vpop.f32.mrf.mxu0
        %v394 = vadd.f32 %v265, %v393
        %v395 = vpop.f32.mrf.mxu0
        %v396 = vadd.f32 %v261, %v395
        %v397 = vpop.f32.mrf.mxu0
        %v398 = vadd.f32 %v265, %v397
        %399 = vmatprep.mubr.bf16.mxu0 0
        %400 = vmatmul.mubr.bf16.gmra.mxu0 %v313
        %v401 = vpop.f32.mrf.mxu0
        %v402 = vadd.f32 %v261, %v401
        %v403 = vpop.f32.mrf.mxu0
        %v404 = vadd.f32 %v265, %v403
        %v405 = vpop.f32.mrf.mxu0
        %v406 = vadd.f32 %v261, %v405
        %v407 = vpop.f32.mrf.mxu0
        %v408 = vadd.f32 %v265, %v407
        %409 = vmatprep.mubr.bf16.mxu0 0
        %410 = vmatmul.mubr.bf16.gmra.mxu0 %v316
        %v411 = vpop.f32.mrf.mxu0
        %v412 = vadd.f32 %v261, %v411
        %v413 = vpop.f32.mrf.mxu0
        %v414 = vadd.f32 %v265, %v413
        %v415 = vpop.f32.mrf.mxu0
        %v416 = vadd.f32 %v261, %v415
        %v417 = vpop.f32.mrf.mxu0
        %v418 = vadd.f32 %v265, %v417
        %419 = vmatprep.mubr.bf16.mxu0 0
        %420 = vmatmul.mubr.bf16.gmra.mxu0 %v319
        %v421 = vpop.f32.mrf.mxu0
        %v422 = vadd.f32 %v261, %v421
        %v423 = vpop.f32.mrf.mxu0
        %v424 = vadd.f32 %v265, %v423
        %v425 = vpop.f32.mrf.mxu0
        %v426 = vadd.f32 %v261, %v425
        %v427 = vpop.f32.mrf.mxu0
        %v428 = vadd.f32 %v265, %v427
        %429 = vmatprep.mubr.bf16.mxu0 0
        %430 = vmatmul.mubr.bf16.gmra.mxu0 %v322
        %v431 = vpop.f32.mrf.mxu0
        %v432 = vadd.f32 %v261, %v431
        %v433 = vpop.f32.mrf.mxu0
        %v434 = vadd.f32 %v265, %v433
        %v435 = vpop.f32.mrf.mxu0
        %v436 = vadd.f32 %v261, %v435
        %v437 = vpop.f32.mrf.mxu0
        %v438 = vadd.f32 %v265, %v437
        %439 = vmatprep.mubr.bf16.mxu0 0
        %440 = vmatmul.mubr.bf16.gmra.mxu0 %v325
        %v441 = vpop.f32.mrf.mxu0
        %v442 = vadd.f32 %v261, %v441
        %v443 = vpop.f32.mrf.mxu0
        %v444 = vadd.f32 %v265, %v443
        %v445 = vpop.f32.mrf.mxu0
        %v446 = vadd.f32 %v261, %v445
        %v447 = vpop.f32.mrf.mxu0
        %v448 = vadd.f32 %v265, %v447
        %449 = vmatprep.mubr.bf16.mxu0 0
        %450 = vmatmul.mubr.bf16.gmra.mxu0 %v328
        %v451 = vpop.f32.mrf.mxu0
        %v452 = vadd.f32 %v261, %v451
        %v453 = vpop.f32.mrf.mxu0
        %v454 = vadd.f32 %v265, %v453
        %v455 = vpop.f32.mrf.mxu0
        %v456 = vadd.f32 %v261, %v455
        %v457 = vpop.f32.mrf.mxu0
        %v458 = vadd.f32 %v265, %v457
        %459 = vmatprep.mubr.bf16.mxu0 0
        %460 = vmatmul.mubr.bf16.gmra.mxu0 %v331
        %v461 = vpop.f32.mrf.mxu0
        %v462 = vadd.f32 %v261, %v461
        %v463 = vpop.f32.mrf.mxu0
        %v464 = vadd.f32 %v265, %v463
        %v465 = vpop.f32.mrf.mxu0
        %v466 = vadd.f32 %v261, %v465
        %v467 = vpop.f32.mrf.mxu0
        %v468 = vadd.f32 %v265, %v467
        %469 = vmatprep.mubr.bf16.mxu0 0
        %470 = vmatmul.mubr.bf16.gmra.mxu0 %v334
        %v471 = vpop.f32.mrf.mxu0
        %v472 = vadd.f32 %v261, %v471
        %v473 = vpop.f32.mrf.mxu0
        %v474 = vadd.f32 %v265, %v473
        %v475 = vpop.f32.mrf.mxu0
        %v476 = vadd.f32 %v261, %v475
        %v477 = vpop.f32.mrf.mxu0
        %v478 = vadd.f32 %v265, %v477
        %479 = vmatprep.mubr.bf16.mxu0 0
        %480 = vmatmul.mubr.bf16.gmra.mxu0 %v337
        %v481 = vpop.f32.mrf.mxu0
        %v482 = vadd.f32 %v261, %v481
        %v483 = vpop.f32.mrf.mxu0
        %v484 = vadd.f32 %v265, %v483
        %v485 = vpop.f32.mrf.mxu0
        %v486 = vadd.f32 %v261, %v485
        %v487 = vpop.f32.mrf.mxu0
        %v488 = vadd.f32 %v265, %v487
        %489 = vmatprep.mubr.bf16.mxu0 0
        %490 = vmatmul.mubr.bf16.gmra.mxu0 %v340
        %v491 = vpop.f32.mrf.mxu0
        %v492 = vadd.f32 %v261, %v491
        %v493 = vpop.f32.mrf.mxu0
        %v494 = vadd.f32 %v265, %v493
        %v495 = vpop.f32.mrf.mxu0
        %v496 = vadd.f32 %v261, %v495
        %v497 = vpop.f32.mrf.mxu0
        %v498 = vadd.f32 %v265, %v497
        %499 = vmatprep.mubr.bf16.mxu0 0
        %500 = vmatmul.mubr.bf16.gmra.mxu0 %v343
        %v501 = vpop.f32.mrf.mxu0
        %v502 = vadd.f32 %v261, %v501
        %v503 = vpop.f32.mrf.mxu0
        %v504 = vadd.f32 %v265, %v503
        %v505 = vpop.f32.mrf.mxu0
        %v506 = vadd.f32 %v261, %v505
        %v507 = vpop.f32.mrf.mxu0
        %v508 = vadd.f32 %v265, %v507
        %509 = vmatprep.mubr.bf16.mxu0 0
        %510 = vmatmul.mubr.bf16.gmra.mxu0 %v346
        %v511 = vpop.f32.mrf.mxu0
        %v512 = vadd.f32 %v261, %v511
        %v513 = vpop.f32.mrf.mxu0
        %v514 = vadd.f32 %v265, %v513
        %v515 = vpop.f32.mrf.mxu0
        %v516 = vadd.f32 %v261, %v515
        %v517 = vpop.f32.mrf.mxu0
        %v518 = vadd.f32 %v265, %v517
        %519 = vmatprep.mubr.bf16.mxu0 0
        %520 = vmatmul.mubr.bf16.gmra.mxu0 %v349
        %v521 = vpop.f32.mrf.mxu0
        %v522 = vadd.f32 %v261, %v521
        %v523 = vpop.f32.mrf.mxu0
        %v524 = vadd.f32 %v265, %v523
        %v525 = vpop.f32.mrf.mxu0
        %v526 = vadd.f32 %v261, %v525
        %v527 = vpop.f32.mrf.mxu0
        %v528 = vadd.f32 %v265, %v527
        %529 = vmatprep.mubr.bf16.mxu0 0
        %530 = vmatmul.mubr.bf16.gmra.mxu0 %v352
        %v531 = vpop.f32.mrf.mxu0
        %v532 = vadd.f32 %v261, %v531
        %v533 = vpop.f32.mrf.mxu0
        %v534 = vadd.f32 %v265, %v533
        %v535 = vpop.f32.mrf.mxu0
        %v536 = vadd.f32 %v261, %v535
        %v537 = vpop.f32.mrf.mxu0
        %v538 = vadd.f32 %v265, %v537
        %539 = vmatprep.mubr.bf16.mxu0 0
        %540 = vmatmul.mubr.bf16.gmra.mxu0 %v355
        %v541 = vpop.f32.mrf.mxu0
        %v542 = vadd.f32 %v261, %v541
        %v543 = vpop.f32.mrf.mxu0
        %v544 = vadd.f32 %v265, %v543
        %v545 = vpop.f32.mrf.mxu0
        %v546 = vadd.f32 %v261, %v545
        %v547 = vpop.f32.mrf.mxu0
        %v548 = vadd.f32 %v265, %v547
        %549 = vdwg.mxu0
        %v550 = vmax.f32 %v392, 0.0
        %v551 = vmax.f32 %v394, 0.0
        %v552 = vmax.f32 %v396, 0.0
        %v553 = vmax.f32 %v398, 0.0
        %v554 = vmax.f32 %v402, 0.0
        %v555 = vmax.f32 %v404, 0.0
        %v556 = vmax.f32 %v406, 0.0
        %v557 = vmax.f32 %v408, 0.0
        %v558 = vmax.f32 %v412, 0.0
        %v559 = vmax.f32 %v414, 0.0
        %v560 = vmax.f32 %v416, 0.0
        %v561 = vmax.f32 %v418, 0.0
        %v562 = vmax.f32 %v422, 0.0
        %v563 = vmax.f32 %v424, 0.0
        %v564 = vmax.f32 %v426, 0.0
        %v565 = vmax.f32 %v428, 0.0
        %v566 = vmax.f32 %v432, 0.0
        %v567 = vmax.f32 %v434, 0.0
        %v568 = vmax.f32 %v436, 0.0
        %v569 = vmax.f32 %v438, 0.0
        %v570 = vmax.f32 %v442, 0.0
        %v571 = vmax.f32 %v444, 0.0
        %v572 = vmax.f32 %v446, 0.0
        %v573 = vmax.f32 %v448, 0.0
        %v574 = vmax.f32 %v452, 0.0
        %v575 = vmax.f32 %v454, 0.0
        %v576 = vmax.f32 %v456, 0.0
        %v577 = vmax.f32 %v458, 0.0
        %v578 = vmax.f32 %v462, 0.0
        %v579 = vmax.f32 %v464, 0.0
        %v580 = vmax.f32 %v466, 0.0
        %v581 = vmax.f32 %v468, 0.0
        %v582 = vmax.f32 %v472, 0.0
        %v583 = vmax.f32 %v474, 0.0
        %v584 = vmax.f32 %v476, 0.0
        %v585 = vmax.f32 %v478, 0.0
        %v586 = vmax.f32 %v482, 0.0
        %v587 = vmax.f32 %v484, 0.0
        %v588 = vmax.f32 %v486, 0.0
        %v589 = vmax.f32 %v488, 0.0
        %v590 = vmax.f32 %v492, 0.0
        %v591 = vmax.f32 %v494, 0.0
        %v592 = vmax.f32 %v496, 0.0
        %v593 = vmax.f32 %v498, 0.0
        %v594 = vmax.f32 %v502, 0.0
        %v595 = vmax.f32 %v504, 0.0
        %v596 = vmax.f32 %v506, 0.0
        %v597 = vmax.f32 %v508, 0.0
        %v598 = vmax.f32 %v512, 0.0
        %v599 = vmax.f32 %v514, 0.0
        %v600 = vmax.f32 %v516, 0.0
        %v601 = vmax.f32 %v518, 0.0
        %v602 = vmax.f32 %v522, 0.0
        %v603 = vmax.f32 %v524, 0.0
        %v604 = vmax.f32 %v526, 0.0
        %v605 = vmax.f32 %v528, 0.0
        %v606 = vmax.f32 %v532, 0.0
        %v607 = vmax.f32 %v534, 0.0
        %v608 = vmax.f32 %v536, 0.0
        %v609 = vmax.f32 %v538, 0.0
        %v610 = vmax.f32 %v542, 0.0
        %v611 = vmax.f32 %v544, 0.0
        %v612 = vmax.f32 %v546, 0.0
        %v613 = vmax.f32 %v548, 0.0
        %v614 = vpack.c.bf16 %v552, %v550
        %v615 = vpack.c.bf16 %v553, %v551
        %v616 = vpack.c.bf16 %v556, %v554
        %v617 = vpack.c.bf16 %v557, %v555
        %v618 = vpack.c.bf16 %v560, %v558
        %v619 = vpack.c.bf16 %v561, %v559
        %v620 = vpack.c.bf16 %v564, %v562
        %v621 = vpack.c.bf16 %v565, %v563
        %v622 = vpack.c.bf16 %v568, %v566
        %v623 = vpack.c.bf16 %v569, %v567
        %v624 = vpack.c.bf16 %v572, %v570
        %v625 = vpack.c.bf16 %v573, %v571
        %v626 = vpack.c.bf16 %v576, %v574
        %v627 = vpack.c.bf16 %v577, %v575
        %v628 = vpack.c.bf16 %v580, %v578
        %v629 = vpack.c.bf16 %v581, %v579
        %v630 = vpack.c.bf16 %v584, %v582
        %v631 = vpack.c.bf16 %v585, %v583
        %v632 = vpack.c.bf16 %v588, %v586
        %v633 = vpack.c.bf16 %v589, %v587
        %v634 = vpack.c.bf16 %v592, %v590
        %v635 = vpack.c.bf16 %v593, %v591
        %v636 = vpack.c.bf16 %v596, %v594
        %v637 = vpack.c.bf16 %v597, %v595
        %v638 = vpack.c.bf16 %v600, %v598
        %v639 = vpack.c.bf16 %v601, %v599
        %v640 = vpack.c.bf16 %v604, %v602
        %v641 = vpack.c.bf16 %v605, %v603
        %v642 = vpack.c.bf16 %v608, %v606
        %v643 = vpack.c.bf16 %v609, %v607
        %v644 = vpack.c.bf16 %v612, %v610
        %v645 = vpack.c.bf16 %v613, %v611
        %v646 = vld [vmem:[%s3] sm:$0xf]
        %v647 = vld [vmem:[%s3 + $0x4] sm:$0xf]
        %v648 = vld [vmem:[%s3 + $0x8] sm:$0xf]
        %v649 = vld [vmem:[%s3 + $0xc] sm:$0xf]
        %v650 = vld [vmem:[%s3 + $0x10] sm:$0xf]
        %v651 = vld [vmem:[%s3 + $0x14] sm:$0xf]
        %v652 = vld [vmem:[%s3 + $0x18] sm:$0xf]
        %v653 = vld [vmem:[%s3 + $0x1c] sm:$0xf]
        %v654 = vld [vmem:[%s3 + $0x20] sm:$0xf]
        %v655 = vld [vmem:[%s3 + $0x24] sm:$0xf]
        %v656 = vld [vmem:[%s3 + $0x28] sm:$0xf]
        %v657 = vld [vmem:[%s3 + $0x2c] sm:$0xf]
        %v658 = vld [vmem:[%s3 + $0x30] sm:$0xf]
        %v659 = vld [vmem:[%s3 + $0x34] sm:$0xf]
        %v660 = vld [vmem:[%s3 + $0x38] sm:$0xf]
        %v661 = vld [vmem:[%s3 + $0x3c] sm:$0xf]
        %v662 = vld [vmem:[%s3 + $0x40] sm:$0xf]
        %v663 = vld [vmem:[%s3 + $0x44] sm:$0xf]
        %v664 = vld [vmem:[%s3 + $0x48] sm:$0xf]
        %v665 = vld [vmem:[%s3 + $0x4c] sm:$0xf]
        %v666 = vld [vmem:[%s3 + $0x50] sm:$0xf]
        %v667 = vld [vmem:[%s3 + $0x54] sm:$0xf]
        %v668 = vld [vmem:[%s3 + $0x58] sm:$0xf]
        %v669 = vld [vmem:[%s3 + $0x5c] sm:$0xf]
        %v670 = vld [vmem:[%s3 + $0x60] sm:$0xf]
        %v671 = vld [vmem:[%s3 + $0x64] sm:$0xf]
        %v672 = vld [vmem:[%s3 + $0x68] sm:$0xf]
        %v673 = vld [vmem:[%s3 + $0x6c] sm:$0xf]
        %v674 = vld [vmem:[%s3 + $0x70] sm:$0xf]
        %v675 = vld [vmem:[%s3 + $0x74] sm:$0xf]
        %v676 = vld [vmem:[%s3 + $0x78] sm:$0xf]
        %v677 = vld [vmem:[%s3 + $0x7c] sm:$0xf]
        %v710 = vunpack.c.l.b16 %v646
        %v711 = vunpack.c.l.b16 %v647
        %v712 = vunpack.c.l.b16 %v648
        %v713 = vunpack.c.l.b16 %v649
        %v714 = vunpack.c.l.b16 %v650
        %v715 = vunpack.c.l.b16 %v651
        %v716 = vunpack.c.l.b16 %v652
        %v717 = vunpack.c.l.b16 %v653
        %v718 = vunpack.c.l.b16 %v654
        %v719 = vunpack.c.l.b16 %v655
        %v720 = vunpack.c.l.b16 %v656
        %v721 = vunpack.c.l.b16 %v657
        %v722 = vunpack.c.l.b16 %v658
        %v723 = vunpack.c.l.b16 %v659
        %v724 = vunpack.c.l.b16 %v660
        %v725 = vunpack.c.l.b16 %v661
        %v726 = vunpack.c.l.b16 %v662
        %v727 = vunpack.c.l.b16 %v663
        %v728 = vunpack.c.l.b16 %v664
        %v729 = vunpack.c.l.b16 %v665
        %v730 = vunpack.c.l.b16 %v666
        %v731 = vunpack.c.l.b16 %v667
        %v732 = vunpack.c.l.b16 %v668
        %v733 = vunpack.c.l.b16 %v669
        %v734 = vunpack.c.l.b16 %v670
        %v735 = vunpack.c.l.b16 %v671
        %v736 = vunpack.c.l.b16 %v672
        %v737 = vunpack.c.l.b16 %v673
        %v738 = vunpack.c.l.b16 %v674
        %v739 = vunpack.c.l.b16 %v675
        %v740 = vunpack.c.l.b16 %v676
        %v741 = vunpack.c.l.b16 %v677
        %v742 = vpack.c.b16 %v711, %v710
        %v743 = vpack.c.b16 %v713, %v712
        %v744 = vpack.c.b16 %v715, %v714
        %v745 = vpack.c.b16 %v717, %v716
        %v746 = vpack.c.b16 %v719, %v718
        %v747 = vpack.c.b16 %v721, %v720
        %v748 = vpack.c.b16 %v723, %v722
        %v749 = vpack.c.b16 %v725, %v724
        %v750 = vpack.c.b16 %v727, %v726
        %v751 = vpack.c.b16 %v729, %v728
        %v752 = vpack.c.b16 %v731, %v730
        %v753 = vpack.c.b16 %v733, %v732
        %v754 = vpack.c.b16 %v735, %v734
        %v755 = vpack.c.b16 %v737, %v736
        %v756 = vpack.c.b16 %v739, %v738
        %v757 = vpack.c.b16 %v741, %v740
        %774 = vmatprep.subr.bf16.mxu0 0
        %775 = vmatpush1.bf16.msra.mxu0 %v749
        %776 = vmatprep.subr.bf16.mxu0 0
        %777 = vmatpush1.bf16.msra.mxu0 %v748
        %778 = vmatprep.subr.bf16.mxu0 0
        %779 = vmatpush1.bf16.msra.mxu0 %v747
        %780 = vmatprep.subr.bf16.mxu0 0
        %781 = vmatpush1.bf16.msra.mxu0 %v746
        %782 = vmatprep.subr.bf16.mxu0 0
        %783 = vmatpush1.bf16.msra.mxu0 %v745
        %784 = vmatprep.subr.bf16.mxu0 0
        %785 = vmatpush1.bf16.msra.mxu0 %v744
        %786 = vmatprep.subr.bf16.mxu0 0
        %787 = vmatpush1.bf16.msra.mxu0 %v743
        %788 = vmatprep.subr.bf16.mxu0 0
        %789 = vmatpush1.bf16.msra.mxu0 %v742
        %790 = vmatprep.subr.bf16.mxu0 0
        %791 = vmatpush2.bf16.msra.mxu0 %v757
        %792 = vmatprep.subr.bf16.mxu0 0
        %793 = vmatpush2.bf16.msra.mxu0 %v756
        %794 = vmatprep.subr.bf16.mxu0 0
        %795 = vmatpush2.bf16.msra.mxu0 %v755
        %796 = vmatprep.subr.bf16.mxu0 0
        %797 = vmatpush2.bf16.msra.mxu0 %v754
        %798 = vmatprep.subr.bf16.mxu0 0
        %799 = vmatpush2.bf16.msra.mxu0 %v753
        %800 = vmatprep.subr.bf16.mxu0 0
        %801 = vmatpush2.bf16.msra.mxu0 %v752
        %802 = vmatprep.subr.bf16.mxu0 0
        %803 = vmatpush2.bf16.msra.mxu0 %v751
        %804 = vmatprep.subr.bf16.mxu0 0
        %805 = vmatpush2.bf16.msra.mxu0 %v750
        %806 = vmatprep.mubr.bf16.mxu0 %v615
        %807 = vmatmul.mubr.bf16.gmra.mxu0 %v614
        %v808 = vpop.f32.mrf.mxu0
        %v809 = vadd.f32 0.0, %v808
        %v810 = vpop.f32.mrf.mxu0
        %v811 = vpop.f32.mrf.mxu0
        %v812 = vadd.f32 0.0, %v811
        %v813 = vpop.f32.mrf.mxu0
        %814 = vmatprep.mubr.bf16.mxu0 %v617
        %815 = vmatmul.mubr.bf16.gmra.mxu0 %v616
        %v816 = vpop.f32.mrf.mxu0
        %v817 = vadd.f32 0.0, %v816
        %v818 = vpop.f32.mrf.mxu0
        %v819 = vpop.f32.mrf.mxu0
        %v820 = vadd.f32 0.0, %v819
        %v821 = vpop.f32.mrf.mxu0
        %822 = vmatprep.mubr.bf16.mxu0 %v619
        %823 = vmatmul.mubr.bf16.gmra.mxu0 %v618
        %v824 = vpop.f32.mrf.mxu0
        %v825 = vadd.f32 0.0, %v824
        %v826 = vpop.f32.mrf.mxu0
        %v827 = vpop.f32.mrf.mxu0
        %v828 = vadd.f32 0.0, %v827
        %v829 = vpop.f32.mrf.mxu0
        %830 = vmatprep.mubr.bf16.mxu0 %v621
        %831 = vmatmul.mubr.bf16.gmra.mxu0 %v620
        %v832 = vpop.f32.mrf.mxu0
        %v833 = vadd.f32 0.0, %v832
        %v834 = vpop.f32.mrf.mxu0
        %v835 = vpop.f32.mrf.mxu0
        %v836 = vadd.f32 0.0, %v835
        %v837 = vpop.f32.mrf.mxu0
        %838 = vmatprep.mubr.bf16.mxu0 %v623
        %839 = vmatmul.mubr.bf16.gmra.mxu0 %v622
        %v840 = vpop.f32.mrf.mxu0
        %v841 = vadd.f32 0.0, %v840
        %v842 = vpop.f32.mrf.mxu0
        %v843 = vpop.f32.mrf.mxu0
        %v844 = vadd.f32 0.0, %v843
        %v845 = vpop.f32.mrf.mxu0
        %846 = vmatprep.mubr.bf16.mxu0 %v625
        %847 = vmatmul.mubr.bf16.gmra.mxu0 %v624
        %v848 = vpop.f32.mrf.mxu0
        %v849 = vadd.f32 0.0, %v848
        %v850 = vpop.f32.mrf.mxu0
        %v851 = vpop.f32.mrf.mxu0
        %v852 = vadd.f32 0.0, %v851
        %v853 = vpop.f32.mrf.mxu0
        %854 = vmatprep.mubr.bf16.mxu0 %v627
        %855 = vmatmul.mubr.bf16.gmra.mxu0 %v626
        %v856 = vpop.f32.mrf.mxu0
        %v857 = vadd.f32 0.0, %v856
        %v858 = vpop.f32.mrf.mxu0
        %v859 = vpop.f32.mrf.mxu0
        %v860 = vadd.f32 0.0, %v859
        %v861 = vpop.f32.mrf.mxu0
        %862 = vmatprep.mubr.bf16.mxu0 %v629
        %863 = vmatmul.mubr.bf16.gmra.mxu0 %v628
        %v864 = vpop.f32.mrf.mxu0
        %v865 = vadd.f32 0.0, %v864
        %v866 = vpop.f32.mrf.mxu0
        %v867 = vpop.f32.mrf.mxu0
        %v868 = vadd.f32 0.0, %v867
        %v869 = vpop.f32.mrf.mxu0
        %870 = vmatprep.mubr.bf16.mxu0 %v631
        %871 = vmatmul.mubr.bf16.gmra.mxu0 %v630
        %v872 = vpop.f32.mrf.mxu0
        %v873 = vadd.f32 0.0, %v872
        %v874 = vpop.f32.mrf.mxu0
        %v875 = vpop.f32.mrf.mxu0
        %v876 = vadd.f32 0.0, %v875
        %v877 = vpop.f32.mrf.mxu0
        %878 = vmatprep.mubr.bf16.mxu0 %v633
        %879 = vmatmul.mubr.bf16.gmra.mxu0 %v632
        %v880 = vpop.f32.mrf.mxu0
        %v881 = vadd.f32 0.0, %v880
        %v882 = vpop.f32.mrf.mxu0
        %v883 = vpop.f32.mrf.mxu0
        %v884 = vadd.f32 0.0, %v883
        %v885 = vpop.f32.mrf.mxu0
        %886 = vmatprep.mubr.bf16.mxu0 %v635
        %887 = vmatmul.mubr.bf16.gmra.mxu0 %v634
        %v888 = vpop.f32.mrf.mxu0
        %v889 = vadd.f32 0.0, %v888
        %v890 = vpop.f32.mrf.mxu0
        %v891 = vpop.f32.mrf.mxu0
        %v892 = vadd.f32 0.0, %v891
        %v893 = vpop.f32.mrf.mxu0
        %894 = vmatprep.mubr.bf16.mxu0 %v637
        %895 = vmatmul.mubr.bf16.gmra.mxu0 %v636
        %v896 = vpop.f32.mrf.mxu0
        %v897 = vadd.f32 0.0, %v896
        %v898 = vpop.f32.mrf.mxu0
        %v899 = vpop.f32.mrf.mxu0
        %v900 = vadd.f32 0.0, %v899
        %v901 = vpop.f32.mrf.mxu0
        %902 = vmatprep.mubr.bf16.mxu0 %v639
        %903 = vmatmul.mubr.bf16.gmra.mxu0 %v638
        %v904 = vpop.f32.mrf.mxu0
        %v905 = vadd.f32 0.0, %v904
        %v906 = vpop.f32.mrf.mxu0
        %v907 = vpop.f32.mrf.mxu0
        %v908 = vadd.f32 0.0, %v907
        %v909 = vpop.f32.mrf.mxu0
        %910 = vmatprep.mubr.bf16.mxu0 %v641
        %911 = vmatmul.mubr.bf16.gmra.mxu0 %v640
        %v912 = vpop.f32.mrf.mxu0
        %v913 = vadd.f32 0.0, %v912
        %v914 = vpop.f32.mrf.mxu0
        %v915 = vpop.f32.mrf.mxu0
        %v916 = vadd.f32 0.0, %v915
        %v917 = vpop.f32.mrf.mxu0
        %918 = vmatprep.mubr.bf16.mxu0 %v643
        %919 = vmatmul.mubr.bf16.gmra.mxu0 %v642
        %v920 = vpop.f32.mrf.mxu0
        %v921 = vadd.f32 0.0, %v920
        %v922 = vpop.f32.mrf.mxu0
        %v923 = vpop.f32.mrf.mxu0
        %v924 = vadd.f32 0.0, %v923
        %v925 = vpop.f32.mrf.mxu0
        %926 = vmatprep.mubr.bf16.mxu0 %v645
        %927 = vmatmul.mubr.bf16.gmra.mxu0 %v644
        %v928 = vpop.f32.mrf.mxu0
        %v929 = vadd.f32 0.0, %v928
        %v930 = vpop.f32.mrf.mxu0
        %v931 = vpop.f32.mrf.mxu0
        %v932 = vadd.f32 0.0, %v931
        %v933 = vpop.f32.mrf.mxu0
        %934 = vdwg.mxu0
        %v935 = vxor.u32 %v809, 2147483648
        %v936 = vxor.u32 %v812, 2147483648
        %v937 = vxor.u32 %v817, 2147483648
        %v938 = vxor.u32 %v820, 2147483648
        %v939 = vxor.u32 %v825, 2147483648
        %v940 = vxor.u32 %v828, 2147483648
        %v941 = vxor.u32 %v833, 2147483648
        %v942 = vxor.u32 %v836, 2147483648
        %v943 = vxor.u32 %v841, 2147483648
        %v944 = vxor.u32 %v844, 2147483648
        %v945 = vxor.u32 %v849, 2147483648
        %v946 = vxor.u32 %v852, 2147483648
        %v947 = vxor.u32 %v857, 2147483648
        %v948 = vxor.u32 %v860, 2147483648
        %v949 = vxor.u32 %v865, 2147483648
        %v950 = vxor.u32 %v868, 2147483648
        %v951 = vxor.u32 %v873, 2147483648
        %v952 = vxor.u32 %v876, 2147483648
        %v953 = vxor.u32 %v881, 2147483648
        %v954 = vxor.u32 %v884, 2147483648
        %v955 = vxor.u32 %v889, 2147483648
        %v956 = vxor.u32 %v892, 2147483648
        %v957 = vxor.u32 %v897, 2147483648
        %v958 = vxor.u32 %v900, 2147483648
        %v959 = vxor.u32 %v905, 2147483648
        %v960 = vxor.u32 %v908, 2147483648
        %v961 = vxor.u32 %v913, 2147483648
        %v962 = vxor.u32 %v916, 2147483648
        %v963 = vxor.u32 %v921, 2147483648
        %v964 = vxor.u32 %v924, 2147483648
        %v965 = vxor.u32 %v929, 2147483648
        %v966 = vxor.u32 %v932, 2147483648
        %v967 = vmul.f32 %v935, 1.442695
        %v968 = vpow.pop %v967
        %v969 = vmul.f32 %v936, 1.442695
        %v970 = vpow.pop %v969
        %v971 = vmul.f32 %v937, 1.442695
        %v972 = vpow.pop %v971
        %v973 = vmul.f32 %v938, 1.442695
        %v974 = vpow.pop %v973
        %v975 = vmul.f32 %v939, 1.442695
        %v976 = vpow.pop %v975
        %v977 = vmul.f32 %v940, 1.442695
        %v978 = vpow.pop %v977
        %v979 = vmul.f32 %v941, 1.442695
        %v980 = vpow.pop %v979
        %v981 = vmul.f32 %v942, 1.442695
        %v982 = vpow.pop %v981
        %v983 = vmul.f32 %v943, 1.442695
        %v984 = vpow.pop %v983
        %v985 = vmul.f32 %v944, 1.442695
        %v986 = vpow.pop %v985
        %v987 = vmul.f32 %v945, 1.442695
        %v988 = vpow.pop %v987
        %v989 = vmul.f32 %v946, 1.442695
        %v990 = vpow.pop %v989
        %v991 = vmul.f32 %v947, 1.442695
        %v992 = vpow.pop %v991
        %v993 = vmul.f32 %v948, 1.442695
        %v994 = vpow.pop %v993
        %v995 = vmul.f32 %v949, 1.442695
        %v996 = vpow.pop %v995
        %v997 = vmul.f32 %v950, 1.442695
        %v998 = vpow.pop %v997
        %v999 = vmul.f32 %v951, 1.442695
        %v1000 = vpow.pop %v999
        %v1001 = vmul.f32 %v952, 1.442695
        %v1002 = vpow.pop %v1001
        %v1003 = vmul.f32 %v953, 1.442695
        %v1004 = vpow.pop %v1003
        %v1005 = vmul.f32 %v954, 1.442695
        %v1006 = vpow.pop %v1005
        %v1007 = vmul.f32 %v955, 1.442695
        %v1008 = vpow.pop %v1007
        %v1009 = vmul.f32 %v956, 1.442695
        %v1010 = vpow.pop %v1009
        %v1011 = vmul.f32 %v957, 1.442695
        %v1012 = vpow.pop %v1011
        %v1013 = vmul.f32 %v958, 1.442695
        %v1014 = vpow.pop %v1013
        %v1015 = vmul.f32 %v959, 1.442695
        %v1016 = vpow.pop %v1015
        %v1017 = vmul.f32 %v960, 1.442695
        %v1018 = vpow.pop %v1017
        %v1019 = vmul.f32 %v961, 1.442695
        %v1020 = vpow.pop %v1019
        %v1021 = vmul.f32 %v962, 1.442695
        %v1022 = vpow.pop %v1021
        %v1023 = vmul.f32 %v963, 1.442695
        %v1024 = vpow.pop %v1023
        %v1025 = vmul.f32 %v964, 1.442695
        %v1026 = vpow.pop %v1025
        %v1027 = vmul.f32 %v965, 1.442695
        %v1028 = vpow.pop %v1027
        %v1029 = vmul.f32 %v966, 1.442695
        %v1030 = vpow.pop %v1029
        %v1031 = vadd.f32 %v968, 1.0
        %v1032 = vadd.f32 %v970, 1.0
        %v1033 = vadd.f32 %v972, 1.0
        %v1034 = vadd.f32 %v974, 1.0
        %v1035 = vadd.f32 %v976, 1.0
        %v1036 = vadd.f32 %v978, 1.0
        %v1037 = vadd.f32 %v980, 1.0
        %v1038 = vadd.f32 %v982, 1.0
        %v1039 = vadd.f32 %v984, 1.0
        %v1040 = vadd.f32 %v986, 1.0
        %v1041 = vadd.f32 %v988, 1.0
        %v1042 = vadd.f32 %v990, 1.0
        %v1043 = vadd.f32 %v992, 1.0
        %v1044 = vadd.f32 %v994, 1.0
        %v1045 = vadd.f32 %v996, 1.0
        %v1046 = vadd.f32 %v998, 1.0
        %v1047 = vadd.f32 %v1000, 1.0
        %v1048 = vadd.f32 %v1002, 1.0
        %v1049 = vadd.f32 %v1004, 1.0
        %v1050 = vadd.f32 %v1006, 1.0
        %v1051 = vadd.f32 %v1008, 1.0
        %v1052 = vadd.f32 %v1010, 1.0
        %v1053 = vadd.f32 %v1012, 1.0
        %v1054 = vadd.f32 %v1014, 1.0
        %v1055 = vadd.f32 %v1016, 1.0
        %v1056 = vadd.f32 %v1018, 1.0
        %v1057 = vadd.f32 %v1020, 1.0
        %v1058 = vadd.f32 %v1022, 1.0
        %v1059 = vadd.f32 %v1024, 1.0
        %v1060 = vadd.f32 %v1026, 1.0
        %v1061 = vadd.f32 %v1028, 1.0
        %v1062 = vadd.f32 %v1030, 1.0
        %v1063 = vrcp.pop %v1031
        %v1064 = vmul.f32 1.0, %v1063
        %v1065 = vrcp.pop %v1032
        %v1066 = vmul.f32 1.0, %v1065
        %v1067 = vrcp.pop %v1033
        %v1068 = vmul.f32 1.0, %v1067
        %v1069 = vrcp.pop %v1034
        %v1070 = vmul.f32 1.0, %v1069
        %v1071 = vrcp.pop %v1035
        %v1072 = vmul.f32 1.0, %v1071
        %v1073 = vrcp.pop %v1036
        %v1074 = vmul.f32 1.0, %v1073
        %v1075 = vrcp.pop %v1037
        %v1076 = vmul.f32 1.0, %v1075
        %v1077 = vrcp.pop %v1038
        %v1078 = vmul.f32 1.0, %v1077
        %v1079 = vrcp.pop %v1039
        %v1080 = vmul.f32 1.0, %v1079
        %v1081 = vrcp.pop %v1040
        %v1082 = vmul.f32 1.0, %v1081
        %v1083 = vrcp.pop %v1041
        %v1084 = vmul.f32 1.0, %v1083
        %v1085 = vrcp.pop %v1042
        %v1086 = vmul.f32 1.0, %v1085
        %v1087 = vrcp.pop %v1043
        %v1088 = vmul.f32 1.0, %v1087
        %v1089 = vrcp.pop %v1044
        %v1090 = vmul.f32 1.0, %v1089
        %v1091 = vrcp.pop %v1045
        %v1092 = vmul.f32 1.0, %v1091
        %v1093 = vrcp.pop %v1046
        %v1094 = vmul.f32 1.0, %v1093
        %v1095 = vrcp.pop %v1047
        %v1096 = vmul.f32 1.0, %v1095
        %v1097 = vrcp.pop %v1048
        %v1098 = vmul.f32 1.0, %v1097
        %v1099 = vrcp.pop %v1049
        %v1100 = vmul.f32 1.0, %v1099
        %v1101 = vrcp.pop %v1050
        %v1102 = vmul.f32 1.0, %v1101
        %v1103 = vrcp.pop %v1051
        %v1104 = vmul.f32 1.0, %v1103
        %v1105 = vrcp.pop %v1052
        %v1106 = vmul.f32 1.0, %v1105
        %v1107 = vrcp.pop %v1053
        %v1108 = vmul.f32 1.0, %v1107
        %v1109 = vrcp.pop %v1054
        %v1110 = vmul.f32 1.0, %v1109
        %v1111 = vrcp.pop %v1055
        %v1112 = vmul.f32 1.0, %v1111
        %v1113 = vrcp.pop %v1056
        %v1114 = vmul.f32 1.0, %v1113
        %v1115 = vrcp.pop %v1057
        %v1116 = vmul.f32 1.0, %v1115
        %v1117 = vrcp.pop %v1058
        %v1118 = vmul.f32 1.0, %v1117
        %v1119 = vrcp.pop %v1059
        %v1120 = vmul.f32 1.0, %v1119
        %v1121 = vrcp.pop %v1060
        %v1122 = vmul.f32 1.0, %v1121
        %v1123 = vrcp.pop %v1061
        %v1124 = vmul.f32 1.0, %v1123
        %v1125 = vrcp.pop %v1062
        %v1126 = vmul.f32 1.0, %v1125
        %v1127 = vpack.c.bf16 %v1066, %v1064
        %v1128 = vpack.c.bf16 %v1070, %v1068
        %v1129 = vpack.c.bf16 %v1074, %v1072
        %v1130 = vpack.c.bf16 %v1078, %v1076
        %v1131 = vpack.c.bf16 %v1082, %v1080
        %v1132 = vpack.c.bf16 %v1086, %v1084
        %v1133 = vpack.c.bf16 %v1090, %v1088
        %v1134 = vpack.c.bf16 %v1094, %v1092
        %v1135 = vpack.c.bf16 %v1098, %v1096
        %v1136 = vpack.c.bf16 %v1102, %v1100
        %v1137 = vpack.c.bf16 %v1106, %v1104
        %v1138 = vpack.c.bf16 %v1110, %v1108
        %v1139 = vpack.c.bf16 %v1114, %v1112
        %v1140 = vpack.c.bf16 %v1118, %v1116
        %v1141 = vpack.c.bf16 %v1122, %v1120
        %v1142 = vpack.c.bf16 %v1126, %v1124
        %v1159 = vunpack.c.l.b16 %v1127
        %v1160 = vunpack.c.h.b16 %v1127
        %v1161 = vunpack.c.l.b16 %v1128
        %v1162 = vunpack.c.h.b16 %v1128
        %v1163 = vunpack.c.l.b16 %v1129
        %v1164 = vunpack.c.h.b16 %v1129
        %v1165 = vunpack.c.l.b16 %v1130
        %v1166 = vunpack.c.h.b16 %v1130
        %v1167 = vunpack.c.l.b16 %v1131
        %v1168 = vunpack.c.h.b16 %v1131
        %v1169 = vunpack.c.l.b16 %v1132
        %v1170 = vunpack.c.h.b16 %v1132
        %v1171 = vunpack.c.l.b16 %v1133
        %v1172 = vunpack.c.h.b16 %v1133
        %v1173 = vunpack.c.l.b16 %v1134
        %v1174 = vunpack.c.h.b16 %v1134
        %v1175 = vunpack.c.l.b16 %v1135
        %v1176 = vunpack.c.h.b16 %v1135
        %v1177 = vunpack.c.l.b16 %v1136
        %v1178 = vunpack.c.h.b16 %v1136
        %v1179 = vunpack.c.l.b16 %v1137
        %v1180 = vunpack.c.h.b16 %v1137
        %v1181 = vunpack.c.l.b16 %v1138
        %v1182 = vunpack.c.h.b16 %v1138
        %v1183 = vunpack.c.l.b16 %v1139
        %v1184 = vunpack.c.h.b16 %v1139
        %v1185 = vunpack.c.l.b16 %v1140
        %v1186 = vunpack.c.h.b16 %v1140
        %v1187 = vunpack.c.l.b16 %v1141
        %v1188 = vunpack.c.h.b16 %v1141
        %v1189 = vunpack.c.l.b16 %v1142
        %v1190 = vunpack.c.h.b16 %v1142
        %v1191 = vpack.c.b16 %v1159, %v1159
        %v1192 = vpack.c.b16 %v1160, %v1160
        %v1193 = vpack.c.b16 %v1161, %v1161
        %v1194 = vpack.c.b16 %v1162, %v1162
        %v1195 = vpack.c.b16 %v1163, %v1163
        %v1196 = vpack.c.b16 %v1164, %v1164
        %v1197 = vpack.c.b16 %v1165, %v1165
        %v1198 = vpack.c.b16 %v1166, %v1166
        %v1199 = vpack.c.b16 %v1167, %v1167
        %v1200 = vpack.c.b16 %v1168, %v1168
        %v1201 = vpack.c.b16 %v1169, %v1169
        %v1202 = vpack.c.b16 %v1170, %v1170
        %v1203 = vpack.c.b16 %v1171, %v1171
        %v1204 = vpack.c.b16 %v1172, %v1172
        %v1205 = vpack.c.b16 %v1173, %v1173
        %v1206 = vpack.c.b16 %v1174, %v1174
        %v1207 = vpack.c.b16 %v1175, %v1175
        %v1208 = vpack.c.b16 %v1176, %v1176
        %v1209 = vpack.c.b16 %v1177, %v1177
        %v1210 = vpack.c.b16 %v1178, %v1178
        %v1211 = vpack.c.b16 %v1179, %v1179
        %v1212 = vpack.c.b16 %v1180, %v1180
        %v1213 = vpack.c.b16 %v1181, %v1181
        %v1214 = vpack.c.b16 %v1182, %v1182
        %v1215 = vpack.c.b16 %v1183, %v1183
        %v1216 = vpack.c.b16 %v1184, %v1184
        %v1217 = vpack.c.b16 %v1185, %v1185
        %v1218 = vpack.c.b16 %v1186, %v1186
        %v1219 = vpack.c.b16 %v1187, %v1187
        %v1220 = vpack.c.b16 %v1188, %v1188
        %v1221 = vpack.c.b16 %v1189, %v1189
        %v1222 = vpack.c.b16 %v1190, %v1190
        %1255 = vst [vmem:[%s191] sm:$0xf] %v1191
        %1256 = vst [vmem:[%s191 + $0x4] sm:$0xf] %v1192
        %1257 = vst [vmem:[%s191 + $0x8] sm:$0xf] %v1193
        %1258 = vst [vmem:[%s191 + $0xc] sm:$0xf] %v1194
        %1259 = vst [vmem:[%s191 + $0x10] sm:$0xf] %v1195
        %1260 = vst [vmem:[%s191 + $0x14] sm:$0xf] %v1196
        %1261 = vst [vmem:[%s191 + $0x18] sm:$0xf] %v1197
        %1262 = vst [vmem:[%s191 + $0x1c] sm:$0xf] %v1198
        %1263 = vst [vmem:[%s191 + $0x20] sm:$0xf] %v1199
        %1264 = vst [vmem:[%s191 + $0x24] sm:$0xf] %v1200
        %1265 = vst [vmem:[%s191 + $0x28] sm:$0xf] %v1201
        %1266 = vst [vmem:[%s191 + $0x2c] sm:$0xf] %v1202
        %1267 = vst [vmem:[%s191 + $0x30] sm:$0xf] %v1203
        %1268 = vst [vmem:[%s191 + $0x34] sm:$0xf] %v1204
        %1269 = vst [vmem:[%s191 + $0x38] sm:$0xf] %v1205
        %1270 = vst [vmem:[%s191 + $0x3c] sm:$0xf] %v1206
        %1271 = vst [vmem:[%s191 + $0x40] sm:$0xf] %v1207
        %1272 = vst [vmem:[%s191 + $0x44] sm:$0xf] %v1208
        %1273 = vst [vmem:[%s191 + $0x48] sm:$0xf] %v1209
        %1274 = vst [vmem:[%s191 + $0x4c] sm:$0xf] %v1210
        %1275 = vst [vmem:[%s191 + $0x50] sm:$0xf] %v1211
        %1276 = vst [vmem:[%s191 + $0x54] sm:$0xf] %v1212
        %1277 = vst [vmem:[%s191 + $0x58] sm:$0xf] %v1213
        %1278 = vst [vmem:[%s191 + $0x5c] sm:$0xf] %v1214
        %1279 = vst [vmem:[%s191 + $0x60] sm:$0xf] %v1215
        %1280 = vst [vmem:[%s191 + $0x64] sm:$0xf] %v1216
        %1281 = vst [vmem:[%s191 + $0x68] sm:$0xf] %v1217
        %1282 = vst [vmem:[%s191 + $0x6c] sm:$0xf] %v1218
        %1283 = vst [vmem:[%s191 + $0x70] sm:$0xf] %v1219
        %1284 = vst [vmem:[%s191 + $0x74] sm:$0xf] %v1220
        %1285 = vst [vmem:[%s191 + $0x78] sm:$0xf] %v1221
        %1286 = vst [vmem:[%s191 + $0x7c] sm:$0xf] %v1222
        %s1287 = sand.u32 %s115, 1
        %s1288 = scalar_lea.sflag [#allocation3], %s1287
        %s1289 = sand.u32 %s115, 1
        %s1290 = smul.addr %s1289, 128
        %s1291 = scalar_lea.vmem [#allocation2], %s1290
        // Predicated region
        $region37: #{tpu_custom_call.1} parent=35 // pred_check
          %p1292 = pneg %p125
        $region38: #{tpu_custom_call.1} parent=35 // pred_check_branch
          %1294 = sbr.rel (%p1292) target = $region40
        $region39: #{tpu_custom_call.1} parent=35 // pred_region
          %s1295 = smul.u32 32, %s18
          %s1297 = ssub.s32 2048, 2048
          %1298 = vsyncadd %s1288, %s1297
          %s1299 = smul.addr %s1295, 64
          %s1300 = scalar_lea.hbm %s4, %s1299
          %s1301 = sshll.u32 %s1291, 4
          %s1302 = int_to_ptr.vmem [resolvable:$true] %s1301
          %1307 = dma.vmem_to_hbm [thread:$0]  %s1302, 2048, %s1300, %s1288, 64, 64, 4
        $region40: #{tpu_custom_call.1} parent=35 // pred_fallthru
          _
      $region36: #{tpu_custom_call.1} parent=5 // pred_fallthru
        _
      %p1308 = scmp.le.s32.totalorder 2, %s13
      // Predicated region
      $region41: #{tpu_custom_call.1} parent=5 // pred_check
        %p1309 = pneg %p1308
      $region42: #{tpu_custom_call.1} parent=5 // pred_check_branch
        %1311 = sbr.rel (%p1309) target = $region44
      $region43: #{tpu_custom_call.1} parent=5 // pred_region
        %s1312 = ssub.s32 %s13, 2
        // Predicated region
        $region45: #{tpu_custom_call.1} parent=43 // pred_check
          %p1313 = pneg %p131
        $region46: #{tpu_custom_call.1} parent=43 // pred_check_branch
          %1315 = sbr.rel (%p1313) target = $region48
        $region47: #{tpu_custom_call.1} parent=43 // pred_region
          %s1316 = sand.u32 %s116, 1
          %s1317 = scalar_lea.sflag [#allocation3], %s1316
          %s1318 = sand.u32 %s116, 1
          %s1319 = smul.addr %s1318, 128
          %s1320 = scalar_lea.vmem [#allocation2], %s1319
          %1321 = dma.done %s1317, 2048
        $region48: #{tpu_custom_call.1} parent=43 // pred_fallthru
          _
      $region44: #{tpu_custom_call.1} parent=5 // pred_fallthru
        _
    $region6: #{tpu_custom_call.1} parent=1 // loop_footer
      %s17 = sadd.s32 1, %s13
    $region7: #{tpu_custom_call.1} parent=1 // loop_footer_branch
      %12 = sbr.rel target = $region3
    $region8: #{tpu_custom_call.1} parent=1 // loop_exit
      _
    %1322 = vsyncpa [#allocation3], 1
    %s1323 = scalar_lea.sflag [#allocation3], 1
    %1324 = vsyncpa %s1323, 1

</llo_original>
